<compile_context>
chip_gen: v7x
topology: tpu7x:2x2x1
jax: 0.10.0
libtpu: 0.0.40
codegen_flags: <defaults>
</compile_context>

<pallas_src>
import jax
import jax.numpy as jnp
from jax import lax
from jax.experimental import pallas as pl
from jax.experimental.pallas import tpu as pltpu

# ----------------------- small, self-consistent config -----------------------
MAX_ATOM_NUM   = 16
ATOM_TYPES     = 9                      # len(config.possible_atoms)
M_DIM          = ATOM_TYPES + 1         # one_hot(node, atom_types + 1) width
BOND_TYPES     = 3                      # len(config.possible_bonds) == b_dim
MAX_DIM        = MAX_ATOM_NUM + ATOM_TYPES   # 25
GRAPH_CONV_DIM = (32, 16)               # rgcn_config['conv_dim'][0]
AUX_DIM        = 32                     # rgcn_config['conv_dim'][1]
LINEAR_DIM     = (32, 32)               # rgcn_config['conv_dim'][2]
BATCH          = 2

D0, D1 = GRAPH_CONV_DIM
L0, L1 = LINEAR_DIM

H1_SEG = 32                             # every head's first-layer width
H1_DIM = 5 * H1_SEG                     # [f|s|e|t|v] fused first-layer outputs = 160
V2_DIM = 16                             # MLP_v second-layer width

# -------------------- output slab layout (one lane-dense row per graph) -------
C_F  = 0                                # masked first-node logits
C_S  = C_F + MAX_DIM                    # 25: raw second-node logits (mask needs sampled `first`)
C_E  = C_S + MAX_DIM                    # 50: edge logits
C_T  = C_E + BOND_TYPES                 # 53: stop logits
C_V  = C_T + 2                          # 55: value
C_PF = C_V + 1                          # 56: softmax(masked first logits)
C_PE = C_PF + MAX_DIM                   # 81: softmax(edge)
C_PT = C_PE + BOND_TYPES                # 84: softmax(stop)
C_END = C_PT + 2                        # 86 used columns
C_VH = C_END                            # 86..101: value-hidden block of the head-2 RHS
OUT_COLS = 128

# ---------------- packed bf16 parameter slab layout (16-row aligned) ----------
_ALIGN = 16                             # bf16 sublane-tile height


def _ra(x):
    return -(-x // _ALIGN) * _ALIGN


R_W1   = 0                              # (M_DIM, D0)
R_W2   = _ra(R_W1 + M_DIM)              # (D0, D1)
R_WAGG = _ra(R_W2 + D0)                 # (D1+M_DIM, 2*AUX)  merged [sigmoid|tanh] gate
R_WH1  = _ra(R_WAGG + D1 + M_DIM)       # (AUX, H1_DIM)      linear_layer folded in
R_WH2  = _ra(R_WH1 + AUX_DIM)           # (H1_DIM, OUT_COLS) in output-lane coords
R_EYE  = _ra(R_WH2 + H1_DIM)            # (n, n) identity (self loop), hoisted constant
R_SEG  = _ra(R_EYE + MAX_ATOM_NUM)      # (B, B*n) per-graph node-sum operator, hoisted
R_BIAS = _ra(R_SEG + BATCH)             # one 16-row aligned bias block
BI_B1, BI_B2, BI_BAGG, BI_BH1, BI_BH2, BI_WV3 = range(6)
SLAB_ROWS = R_BIAS + _ALIGN             # 320
SLAB_COLS = H1_DIM                      # 160


def _leaky(x, slope=0.1):
    return jnp.where(x > 0, x, slope * x)


def _softmax(x):
    m = jnp.max(x, axis=-1, keepdims=True)
    e = jnp.exp(x - m)
    return e * pl.reciprocal(jnp.sum(e, axis=-1, keepdims=True), approx=True)


# --------------------------------- kernel ------------------------------------
def policy_kernel(nidcol_ref, nid_ref, adj_ref, slab_ref, out_ref):
    f32, bf16 = jnp.float32, jnp.bfloat16
    adj = adj_ref[...]                                   # (B, BOND, n, n) f32
    B, n = adj.shape[0], adj.shape[-1]

    def dot(a, b):                                       # bf16 operands, f32 accumulate
        return jnp.dot(a.astype(bf16), b.astype(bf16), preferred_element_type=f32)

    # ---- static views into the single packed bf16 weight slab ----------------
    w1   = slab_ref[R_W1:R_W1 + M_DIM, 0:D0]
    w2   = slab_ref[R_W2:R_W2 + D0, 0:D1]
    wagg = slab_ref[R_WAGG:R_WAGG + D1 + M_DIM, 0:2 * AUX_DIM]
    wh1  = slab_ref[R_WH1:R_WH1 + AUX_DIM, 0:H1_DIM]
    wh2  = slab_ref[R_WH2:R_WH2 + H1_DIM, 0:OUT_COLS]
    eyen = slab_ref[R_EYE:R_EYE + n, 0:n].astype(f32)
    seg  = slab_ref[R_SEG:R_SEG + B, 0:B * n]
    bias = slab_ref[R_BIAS:R_BIAS + _ALIGN, 0:SLAB_COLS].astype(f32)  # one aligned load
    b1   = bias[BI_B1:BI_B1 + 1, 0:D0]
    b2   = bias[BI_B2:BI_B2 + 1, 0:D1]
    bagg = bias[BI_BAGG:BI_BAGG + 1, 0:2 * AUX_DIM]
    bh1  = bias[BI_BH1:BI_BH1 + 1, 0:H1_DIM]
    bh2  = bias[BI_BH2:BI_BH2 + 1, 0:OUT_COLS]
    wv3  = bias[BI_WV3:BI_WV3 + 1, 0:V2_DIM]
    bv3  = bias[BI_WV3:BI_WV3 + 1, V2_DIM:V2_DIM + 1]

    # ---- fused one_hot(node, atom_types + 1) ---------------------------------
    nid_col = nidcol_ref[...]                            # (B*n, 1) int32
    cidx = lax.broadcasted_iota(jnp.int32, (B * n, M_DIM), 1)
    ann2 = (cidx == nid_col).astype(f32)                 # (B*n, M_DIM)

    # ---- GraphConvolution operator:  sum_b D_b^-1 A_b  +  I  -----------------
    deg = jnp.sum(adj, axis=-1, keepdims=True) + 1.0     # row degree incl. self loop
    adj_sum = jnp.sum(adj * pl.reciprocal(deg, approx=True), axis=1)   # (B, n, n)
    adj_sum = adj_sum + eyen[None]                       # +I folded into the operator

    # block-diagonal (B*n, B*n) operator keeps the whole pipeline 2D (no reshapes)
    # TODO(synk): at large B switch to per-graph batched matmuls + a batch grid
    # axis (dimension_semantics=("parallel",...)); block-diag is O(B^2) in
    # FLOPs/VMEM and will hit the v7x 64 MiB VMEM first.
    zblk = jnp.zeros((n, n), f32)
    adj_bd = jnp.concatenate(
        [jnp.concatenate([adj_sum[b] if c == b else zblk for c in range(B)], axis=1)
         for b in range(B)], axis=0)                     # (B*n, B*n)

    # ---- GCN layers: tanh((sum_b D^-1 A_b + I) @ (X W)) ----------------------
    h0 = dot(ann2, w1) + b1                              # (B*n, D0)
    hidden = jnp.tanh(dot(adj_bd, h0))
    h1 = dot(hidden, w2) + b2                            # (B*n, D1)
    gout = jnp.tanh(dot(adj_bd, h1))

    # ---- GraphAggregation: single merged sigmoid|tanh gate matmul ------------
    agg_in = jnp.concatenate([gout, ann2], axis=-1)      # (B*n, D1 + M_DIM)
    gates = dot(agg_in, wagg) + bagg                     # (B*n, 2*AUX)
    prod = jax.nn.sigmoid(gates[:, 0:AUX_DIM]) * jnp.tanh(gates[:, AUX_DIM:2 * AUX_DIM])
    hagg = jnp.tanh(dot(seg, prod))                      # (B, AUX) per-graph node sum

    # ---- linear_layer + head first layers (folded together at pack time) -----
    a1 = _leaky(dot(hagg, wh1) + bh1)                    # (B, 160)

    # ---- head second layers, landing directly in output-lane coordinates -----
    o2 = dot(a1, wh2) + bh2                              # (B, 128)

    # ---- fused epilogue: Mask_first, value-head tail, softmaxes --------------
    # TODO(synk): Mask_first is an external helper; placeholder = existing atoms.
    exists = (nid_ref[...] > 0).astype(f32)              # (B, n)
    exists_w = jnp.concatenate(
        [exists, jnp.zeros((B, OUT_COLS - n), f32)], axis=-1)
    colw = lax.broadcasted_iota(jnp.int32, (B, OUT_COLS), 1)
    mask_add = jnp.where(colw < C_F + MAX_DIM, (exists_w - 1.0) * 10000.0, 0.0)
    o2m = o2 + mask_add                                  # first-node logits masked in place

    vh = _leaky(o2[:, C_VH:C_VH + V2_DIM])               # (B, 16) value hidden
    value = jnp.sum(vh * wv3, axis=-1, keepdims=True) + bv3   # VPU mul + lane reduce (no MXU)

    out_ref[...] = jnp.where(colw < C_PF, o2m, 0.0)      # logits block, zeroed pad/scratch
    out_ref[:, C_V:C_V + 1] = value
    out_ref[:, C_PF:C_PF + MAX_DIM] = _softmax(o2m[:, C_F:C_F + MAX_DIM])
    out_ref[:, C_PE:C_PE + BOND_TYPES] = _softmax(o2m[:, C_E:C_E + BOND_TYPES])
    out_ref[:, C_PT:C_PT + 2] = _softmax(o2m[:, C_T:C_T + 2])


# ------------------------------- pallas wrapper -------------------------------
def policy_net_pallas(node_col, node_idx, adj_sl, slab):
    B = adj_sl.shape[0]
    vspec = pl.BlockSpec(memory_space=pltpu.MemorySpace.VMEM)
    # Single program, whole (tiny) arrays resident in VMEM.
    # TODO(synk): when B is scaled up, add a batch grid axis with
    # dimension_semantics=("parallel",) so both v7x TensorCores get work.
    return pl.pallas_call(
        policy_kernel,
        out_shape=jax.ShapeDtypeStruct((B, OUT_COLS), jnp.float32),
        in_specs=[vspec, vspec, vspec, vspec],
        out_specs=vspec,
        compiler_params=pltpu.CompilerParams(vmem_limit_bytes=32 * 1024 * 1024),
    )(node_col, node_idx, adj_sl, slab)


# ----------------------------- parameters (synthetic) -------------------------
def init_params(key):
    d0, d1 = GRAPH_CONV_DIM
    l0, l1 = LINEAR_DIM
    shapes_w = [
        (M_DIM, d0), (d0, d1),                              # gcn linear1, linear2
        (d1, AUX_DIM), (M_DIM, AUX_DIM),                    # agg sigmoid (split)
        (d1, AUX_DIM), (M_DIM, AUX_DIM),                    # agg tanh    (split)
        (AUX_DIM, l0), (l0, l1),                            # linear_layer
        (l1, 32), (32, MAX_DIM),                            # MLP_f (no bias)
        (l1, 32), (32, MAX_DIM),                            # MLP_s (no bias)
        (l1, 32), (32, BOND_TYPES),                         # MLP_e (no bias)
        (l1, 32), (32, 2),                                  # MLP_t
        (l1, 32), (32, 16), (16, 1),                        # MLP_v
    ]
    ks = jax.random.split(key, len(shapes_w))
    ws = [jax.random.normal(k, s, jnp.float32) / jnp.sqrt(s[0])
          for k, s in zip(ks, shapes_w)]
    (w1, w2, wsg_h, wsg_n, wth_h, wth_n, wl0, wl1,
     wf1, wf2, ws1, ws2, we1, we2, wt1, wt2, wv1, wv2, wv3) = ws
    z = lambda d: jnp.zeros((1, d), jnp.float32) + 0.01     # deterministic biases
    return [w1, z(d0), w2, z(d1),
            wsg_h, wsg_n, z(AUX_DIM),
            wth_h, wth_n, z(AUX_DIM),
            wl0, z(l0), wl1, z(l1),
            wf1, wf2, ws1, ws2, we1, we2,
            wt1, z(32), wt2, z(2),
            wv1, z(32), wv2, z(16), wv3, z(1)]


def pack_params(params):
    """Fuse + pack all weights/biases into one (SLAB_ROWS, SLAB_COLS) bf16 slab."""
    (w1, b1, w2, b2, wsg_h, wsg_n, bsg, wth_h, wth_n, bth,
     wl0, bl0, wl1, bl1,
     wf1, wf2, ws1, ws2, we1, we2,
     wt1, bt1, wt2, bt2,
     wv1, bv1, wv2, bv2, wv3, bv3) = params
    f32 = jnp.float32

    # merged GraphAggregation gate:  [gout|ann] @ [[Wh_sig|Wh_tanh],[Wn_sig|Wn_tanh]]
    wagg = jnp.concatenate(
        [jnp.concatenate([wsg_h, wth_h], axis=1),
         jnp.concatenate([wsg_n, wth_n], axis=1)], axis=0)            # (D1+M_DIM, 64)
    bagg = jnp.concatenate([bsg, bth], axis=1)                        # (1, 64)

    # linear_layer (no nonlinearity) folded into the concatenated head first layer
    wh1_cat = jnp.concatenate([wf1, ws1, we1, wt1, wv1], axis=1)      # (L1, 160)
    bh1_cat = jnp.concatenate(
        [jnp.zeros((1, 3 * H1_SEG), f32), bt1, bv1], axis=1)          # (1, 160)
    w_head1 = wl0 @ wl1 @ wh1_cat                                     # (AUX, 160)
    b_head1 = bl0 @ wl1 @ wh1_cat + bl1 @ wh1_cat + bh1_cat           # (1, 160)

    # head second layers placed directly in output-slab lane coordinates
    w_head2 = jnp.zeros((H1_DIM, OUT_COLS), f32)
    w_head2 = w_head2.at[0 * H1_SEG:1 * H1_SEG, C_F:C_F + MAX_DIM].set(wf2)
    w_head2 = w_head2.at[1 * H1_SEG:2 * H1_SEG, C_S:C_S + MAX_DIM].set(ws2)
    w_head2 = w_head2.at[2 * H1_SEG:3 * H1_SEG, C_E:C_E + BOND_TYPES].set(we2)
    w_head2 = w_head2.at[3 * H1_SEG:4 * H1_SEG, C_T:C_T + 2].set(wt2)
    w_head2 = w_head2.at[4 * H1_SEG:5 * H1_SEG, C_VH:C_VH + V2_DIM].set(wv2)
    b_head2 = jnp.zeros((1, OUT_COLS), f32)
    b_head2 = b_head2.at[:, C_T:C_T + 2].set(bt2)
    b_head2 = b_head2.at[:, C_VH:C_VH + V2_DIM].set(bv2)

    # hoisted constants: n x n identity + per-graph segment-sum operator
    eye_n = jnp.eye(MAX_ATOM_NUM, dtype=f32)
    seg = (jnp.arange(BATCH * MAX_ATOM_NUM)[None, :] // MAX_ATOM_NUM
           == jnp.arange(BATCH)[:, None]).astype(f32)                 # (B, B*n)

    wv3row = jnp.concatenate([wv3.T, bv3], axis=1)                    # (1, 17) = [wv3^T | bv3]

    slab = jnp.zeros((SLAB_ROWS, SLAB_COLS), f32)

    def put(s, r, w):
        return s.at[r:r + w.shape[0], 0:w.shape[1]].set(w)

    for r, w in [(R_W1, w1), (R_W2, w2), (R_WAGG, wagg), (R_WH1, w_head1),
                 (R_WH2, w_head2), (R_EYE, eye_n), (R_SEG, seg),
                 (R_BIAS + BI_B1, b1), (R_BIAS + BI_B2, b2),
                 (R_BIAS + BI_BAGG, bagg), (R_BIAS + BI_BH1, b_head1),
                 (R_BIAS + BI_BH2, b_head2), (R_BIAS + BI_WV3, wv3row)]:
        slab = put(slab, r, w)
    return slab.astype(jnp.bfloat16)     # bf16: MXU-native + ~2.4x smaller weight DMA


# -------------------------- masks / glue (plain JAX) ---------------------------
def mask_first(node_idx):
    # TODO(synk): Mask_first is an external helper not shipped with the module;
    # placeholder: existing atoms (nonzero slots) are valid first-node picks.
    exists = (node_idx > 0).astype(jnp.float32)
    pad = jnp.zeros((node_idx.shape[0], MAX_DIM - MAX_ATOM_NUM), jnp.float32)
    return jnp.concatenate([exists, pad], axis=-1)


def mask_second(node_idx, first):
    # TODO(synk): Mask_second is external; placeholder: existing atoms except the
    # chosen first node, plus all scaffold atom-type slots, are valid.
    idx = jnp.arange(MAX_ATOM_NUM)[None, :]
    exists = ((node_idx > 0) & (idx != first[:, None])).astype(jnp.float32)
    scaffold = jnp.ones((node_idx.shape[0], MAX_DIM - MAX_ATOM_NUM), jnp.float32)
    return jnp.concatenate([exists, scaffold], axis=-1)


@jax.jit
def forward(N, adj, key, slab):
    node_idx = N[:, :MAX_ATOM_NUM].astype(jnp.int32)
    adj_sl = adj[:, :, :MAX_ATOM_NUM, :MAX_ATOM_NUM].astype(jnp.float32)

    o = policy_net_pallas(node_idx.reshape(-1, 1), node_idx, adj_sl, slab)
    logits_f  = o[:, C_F:C_F + MAX_DIM]                  # masked + fused in-kernel
    outs_raw  = o[:, C_S:C_S + MAX_DIM]
    oute      = o[:, C_E:C_E + BOND_TYPES]
    outt      = o[:, C_T:C_T + 2]
    value     = o[:, C_V:C_V + 1]
    out_first = o[:, C_PF:C_PF + MAX_DIM]
    out_edge  = o[:, C_PE:C_PE + BOND_TYPES]
    out_stop  = o[:, C_PT:C_PT + 2]

    k1, k2, k3, k4 = jax.random.split(key, 4)
    first = jax.random.categorical(k1, logits_f, axis=-1)

    # TODO(synk): the second-node mask depends on the sampled `first`; in-kernel
    # Gumbel-max sampling (pltpu.prng_*) could fuse this too, kept outside for now.
    logits_s = (mask_second(node_idx, first) - 1.0) * 10000.0 + outs_raw
    out_second = jax.nn.softmax(logits_s, axis=1)
    second = jax.random.categorical(k2, logits_s, axis=-1)

    edge = jax.random.categorical(k3, oute, axis=-1)
    stop = jax.random.categorical(k4, outt, axis=-1)

    return (out_first, out_second, out_edge, out_stop), (first, second, edge, stop), value


# ----------------------------- pure-JAX reference ------------------------------
def reference_logits(ann, adj_sl, params):
    (w1, b1, w2, b2, wsg_h, wsg_n, bsg, wth_h, wth_n, bth, wl0, bl0, wl1, bl1,
     wf1, wf2, ws1, ws2, we1, we2, wt1, bt1, wt2, bt2,
     wv1, bv1, wv2, bv2, wv3, bv3) = params
    n = ann.shape[1]
    deg = jnp.sum(adj_sl + jnp.eye(n), axis=-1, keepdims=True)
    adj_sum = jnp.sum(adj_sl / deg, axis=1)
    h0 = ann @ w1 + b1
    hidden = jnp.tanh(jnp.einsum('bij,bjk->bik', adj_sum, h0) + h0)
    h1 = hidden @ w2 + b2
    gout = jnp.tanh(jnp.einsum('bij,bjk->bik', adj_sum, h1) + h1)
    i = jax.nn.sigmoid(gout @ wsg_h + ann @ wsg_n + bsg)
    j = jnp.tanh(gout @ wth_h + ann @ wth_n + bth)
    hagg = jnp.tanh(jnp.sum(i * j, axis=1))
    h = (hagg @ wl0 + bl0) @ wl1 + bl1
    lk = lambda x: jnp.where(x > 0, x, 0.1 * x)
    outf = lk(h @ wf1) @ wf2
    outs = lk(h @ ws1) @ ws2
    oute = lk(h @ we1) @ we2
    outt = lk(h @ wt1 + bt1) @ wt2 + bt2
    v = lk(lk(h @ wv1 + bv1) @ wv2 + bv2) @ wv3 + bv3
    return outf, outs, oute, outt, v


# ------------------------------------ main -------------------------------------
if __name__ == "__main__":
    key = jax.random.PRNGKey(0)
    kp, kn, ka, ks = jax.random.split(key, 4)
    params = init_params(kp)
    slab = pack_params(params)          # fused + packed once, reused every call

    # N: integer node-type list (0 = empty slot, 1..ATOM_TYPES = atom type)
    N = jax.random.randint(kn, (BATCH, MAX_DIM), 0, ATOM_TYPES + 1)
    # adjacency: (B, BOND_TYPES, MAX_DIM, MAX_DIM), binary symmetric
    a = jax.random.uniform(ka, (BATCH, BOND_TYPES, MAX_DIM, MAX_DIM))
    adj = ((a + jnp.swapaxes(a, -1, -2)) > 1.0).astype(jnp.float32)

    output, action, value = forward(N, adj, ks, slab)
    jax.block_until_ready(output)
    jax.block_until_ready(action)
    jax.block_until_ready(value)

    # correctness check of the kernel hot path against an unfused pure-f32 reference
    node_idx = N[:, :MAX_ATOM_NUM].astype(jnp.int32)
    adj_sl = adj[:, :, :MAX_ATOM_NUM, :MAX_ATOM_NUM]
    ann = jax.nn.one_hot(node_idx, ATOM_TYPES + 1, dtype=jnp.float32)
    mask_f = mask_first(node_idx)
    ref_f, ref_s, ref_e, ref_t, ref_v = reference_logits(ann, adj_sl, params)
    ref_mlf = (mask_f - 1.0) * 10000.0 + ref_f

    got = policy_net_pallas(node_idx.reshape(-1, 1), node_idx, adj_sl, slab)
    jax.block_until_ready(got)
    # bf16 weights + approx reciprocals shift results by ~1e-3..1e-2 vs the f32 ref.
    checks = [
        (ref_mlf, got[:, C_F:C_F + MAX_DIM]),
        (ref_s,   got[:, C_S:C_S + MAX_DIM]),
        (ref_e,   got[:, C_E:C_E + BOND_TYPES]),
        (ref_t,   got[:, C_T:C_T + 2]),
        (ref_v,   got[:, C_V:C_V + 1]),
        (jax.nn.softmax(ref_mlf, axis=-1), got[:, C_PF:C_PF + MAX_DIM]),
        (jax.nn.softmax(ref_e, axis=-1),   got[:, C_PE:C_PE + BOND_TYPES]),
        (jax.nn.softmax(ref_t, axis=-1),   got[:, C_PT:C_PT + 2]),
    ]
    for r, g in checks:
        assert r.shape == g.shape
        assert jnp.allclose(r, g, atol=3e-2, rtol=3e-2), (r, g)

    print("KERNEL_OK")
</pallas_src>

<mosaic_0001>
module attributes {stable_mosaic.version = 11 : i64} {
  func.func @policy_kernel(%arg0: memref<32x1xi32, #tpu.memory_space<vmem>>, %arg1: memref<2x16xi32, #tpu.memory_space<vmem>>, %arg2: memref<2x3x16x16xf32, #tpu.memory_space<vmem>>, %arg3: memref<320x160xbf16, #tpu.memory_space<vmem>>, %arg4: memref<2x128xf32, #tpu.memory_space<vmem>>) attributes {dimension_semantics = [], scalar_prefetch = 0 : i64, scratch_operands = 0 : i64, tpu.core_type = #tpu.core_type<tc>} {
    %c0 = arith.constant 0 : index
    %c0_0 = arith.constant 0 : index
    %c0_1 = arith.constant 0 : index
    %c0_2 = arith.constant 0 : index
    %0 = vector.load %arg2[%c0, %c0_0, %c0_1, %c0_2] : memref<2x3x16x16xf32, #tpu.memory_space<vmem>>, vector<2x3x16x16xf32>
    %c0_3 = arith.constant 0 : index
    %c0_4 = arith.constant 0 : index
    %1 = vector.load %arg3[%c0_3, %c0_4] : memref<320x160xbf16, #tpu.memory_space<vmem>>, vector<10x32xbf16>
    %c16 = arith.constant 16 : index
    %c0_5 = arith.constant 0 : index
    %2 = vector.load %arg3[%c16, %c0_5] : memref<320x160xbf16, #tpu.memory_space<vmem>>, vector<32x16xbf16>
    %c48 = arith.constant 48 : index
    %c0_6 = arith.constant 0 : index
    %3 = vector.load %arg3[%c48, %c0_6] : memref<320x160xbf16, #tpu.memory_space<vmem>>, vector<26x64xbf16>
    %c80 = arith.constant 80 : index
    %c0_7 = arith.constant 0 : index
    %4 = vector.load %arg3[%c80, %c0_7] : memref<320x160xbf16, #tpu.memory_space<vmem>>, vector<32x160xbf16>
    %c112 = arith.constant 112 : index
    %c0_8 = arith.constant 0 : index
    %5 = vector.load %arg3[%c112, %c0_8] : memref<320x160xbf16, #tpu.memory_space<vmem>>, vector<160x128xbf16>
    %c272 = arith.constant 272 : index
    %c0_9 = arith.constant 0 : index
    %6 = vector.load %arg3[%c272, %c0_9] : memref<320x160xbf16, #tpu.memory_space<vmem>>, vector<16x16xbf16>
    %7 = arith.extf %6 : vector<16x16xbf16> to vector<16x16xf32>
    %c288 = arith.constant 288 : index
    %c0_10 = arith.constant 0 : index
    %8 = vector.load %arg3[%c288, %c0_10] : memref<320x160xbf16, #tpu.memory_space<vmem>>, vector<2x32xbf16>
    %c304 = arith.constant 304 : index
    %c0_11 = arith.constant 0 : index
    %9 = vector.load %arg3[%c304, %c0_11] : memref<320x160xbf16, #tpu.memory_space<vmem>>, vector<16x160xbf16>
    %10 = arith.extf %9 : vector<16x160xbf16> to vector<16x160xf32>
    %11 = vector.extract_strided_slice %10 {offsets = [0, 0], sizes = [1, 32], strides = [1, 1]} : vector<16x160xf32> to vector<1x32xf32>
    %12 = vector.extract_strided_slice %10 {offsets = [1, 0], sizes = [1, 16], strides = [1, 1]} : vector<16x160xf32> to vector<1x16xf32>
    %13 = vector.extract_strided_slice %10 {offsets = [2, 0], sizes = [1, 64], strides = [1, 1]} : vector<16x160xf32> to vector<1x64xf32>
    %14 = vector.extract_strided_slice %10 {offsets = [3, 0], sizes = [1, 160], strides = [1, 1]} : vector<16x160xf32> to vector<1x160xf32>
    %15 = vector.extract_strided_slice %10 {offsets = [4, 0], sizes = [1, 128], strides = [1, 1]} : vector<16x160xf32> to vector<1x128xf32>
    %16 = vector.extract_strided_slice %10 {offsets = [5, 0], sizes = [1, 16], strides = [1, 1]} : vector<16x160xf32> to vector<1x16xf32>
    %17 = vector.extract_strided_slice %10 {offsets = [5, 16], sizes = [1, 1], strides = [1, 1]} : vector<16x160xf32> to vector<1x1xf32>
    %c0_12 = arith.constant 0 : index
    %c0_13 = arith.constant 0 : index
    %18 = vector.load %arg0[%c0_12, %c0_13] : memref<32x1xi32, #tpu.memory_space<vmem>>, vector<32x1xi32>
    %19 = tpu.iota {dimensions = array<i32: 1>} : vector<32x10xi32>
    %20 = vector.broadcast %18 : vector<32x1xi32> to vector<32x10xi32>
    %21 = arith.cmpi eq, %19, %20 : vector<32x10xi32>
    %22 = arith.extui %21 : vector<32x10xi1> to vector<32x10xi32>
    %23 = arith.sitofp %22 : vector<32x10xi32> to vector<32x10xf32>
    %cst = arith.constant dense<0.000000e+00> : vector<2x3x16xf32>
    %24 = vector.multi_reduction <add>, %0, %cst [3] : vector<2x3x16x16xf32> to vector<2x3x16xf32>
    %25 = vector.shape_cast %24 : vector<2x3x16xf32> to vector<2x3x16x1xf32>
    %cst_14 = arith.constant 1.000000e+00 : f32
    %26 = vector.broadcast %cst_14 : f32 to vector<2x3x16x1xf32>
    %27 = arith.addf %25, %26 : vector<2x3x16x1xf32>
    %28 = tpu.reciprocal %27 {approx = true} : vector<2x3x16x1xf32> -> vector<2x3x16x1xf32>
    %29 = vector.broadcast %28 : vector<2x3x16x1xf32> to vector<2x3x16x16xf32>
    %30 = arith.mulf %0, %29 : vector<2x3x16x16xf32>
    %cst_15 = arith.constant dense<0.000000e+00> : vector<2x16x16xf32>
    %31 = vector.multi_reduction <add>, %30, %cst_15 [1] : vector<2x3x16x16xf32> to vector<2x16x16xf32>
    %32 = vector.shape_cast %7 : vector<16x16xf32> to vector<1x16x16xf32>
    %33 = vector.broadcast %32 : vector<1x16x16xf32> to vector<2x16x16xf32>
    %34 = arith.addf %31, %33 : vector<2x16x16xf32>
    %cst_16 = arith.constant 0.000000e+00 : f32
    %35 = vector.broadcast %cst_16 : f32 to vector<16x16xf32>
    %36 = vector.extract_strided_slice %34 {offsets = [0, 0, 0], sizes = [1, 16, 16], strides = [1, 1, 1]} : vector<2x16x16xf32> to vector<1x16x16xf32>
    %37 = vector.shape_cast %36 : vector<1x16x16xf32> to vector<16x16xf32>
    %38 = tpu.concatenate %37, %35 in 1 : vector<16x16xf32>, vector<16x16xf32> -> vector<16x32xf32>
    %39 = vector.extract_strided_slice %34 {offsets = [1, 0, 0], sizes = [1, 16, 16], strides = [1, 1, 1]} : vector<2x16x16xf32> to vector<1x16x16xf32>
    %40 = vector.shape_cast %39 : vector<1x16x16xf32> to vector<16x16xf32>
    %41 = tpu.concatenate %35, %40 in 1 : vector<16x16xf32>, vector<16x16xf32> -> vector<16x32xf32>
    %42 = tpu.concatenate %38, %41 in 0 : vector<16x32xf32>, vector<16x32xf32> -> vector<32x32xf32>
    %43 = arith.truncf %23 : vector<32x10xf32> to vector<32x10xbf16>
    %cst_17 = arith.constant dense<0.000000e+00> : vector<32x32xf32>
    %44 = tpu.matmul %43, %1, %cst_17 {dimension_numbers = #tpu.dot_dimension_numbers<[1], [0], [0], [1], [0, 0, 1, 1], [], []>} : vector<32x10xbf16>, vector<10x32xbf16>, vector<32x32xf32> -> vector<32x32xf32>
    %45 = vector.broadcast %11 : vector<1x32xf32> to vector<32x32xf32>
    %46 = arith.addf %44, %45 : vector<32x32xf32>
    %47 = arith.truncf %42 : vector<32x32xf32> to vector<32x32xbf16>
    %48 = arith.truncf %46 : vector<32x32xf32> to vector<32x32xbf16>
    %cst_18 = arith.constant dense<0.000000e+00> : vector<32x32xf32>
    %49 = tpu.matmul %47, %48, %cst_18 {dimension_numbers = #tpu.dot_dimension_numbers<[1], [0], [0], [1], [0, 0, 1, 1], [], []>} : vector<32x32xbf16>, vector<32x32xbf16>, vector<32x32xf32> -> vector<32x32xf32>
    %50 = math.tanh %49 : vector<32x32xf32>
    %51 = arith.truncf %50 : vector<32x32xf32> to vector<32x32xbf16>
    %cst_19 = arith.constant dense<0.000000e+00> : vector<32x16xf32>
    %52 = tpu.matmul %51, %2, %cst_19 {dimension_numbers = #tpu.dot_dimension_numbers<[1], [0], [0], [1], [0, 0, 1, 1], [], []>} : vector<32x32xbf16>, vector<32x16xbf16>, vector<32x16xf32> -> vector<32x16xf32>
    %53 = vector.broadcast %12 : vector<1x16xf32> to vector<32x16xf32>
    %54 = arith.addf %52, %53 : vector<32x16xf32>
    %55 = arith.truncf %42 : vector<32x32xf32> to vector<32x32xbf16>
    %56 = arith.truncf %54 : vector<32x16xf32> to vector<32x16xbf16>
    %cst_20 = arith.constant dense<0.000000e+00> : vector<32x16xf32>
    %57 = tpu.matmul %55, %56, %cst_20 {dimension_numbers = #tpu.dot_dimension_numbers<[1], [0], [0], [1], [0, 0, 1, 1], [], []>} : vector<32x32xbf16>, vector<32x16xbf16>, vector<32x16xf32> -> vector<32x16xf32>
    %58 = math.tanh %57 : vector<32x16xf32>
    %59 = tpu.concatenate %58, %23 in 1 : vector<32x16xf32>, vector<32x10xf32> -> vector<32x26xf32>
    %60 = arith.truncf %59 : vector<32x26xf32> to vector<32x26xbf16>
    %cst_21 = arith.constant dense<0.000000e+00> : vector<32x64xf32>
    %61 = tpu.matmul %60, %3, %cst_21 {dimension_numbers = #tpu.dot_dimension_numbers<[1], [0], [0], [1], [0, 0, 1, 1], [], []>} : vector<32x26xbf16>, vector<26x64xbf16>, vector<32x64xf32> -> vector<32x64xf32>
    %62 = vector.broadcast %13 : vector<1x64xf32> to vector<32x64xf32>
    %63 = arith.addf %61, %62 : vector<32x64xf32>
    %64 = vector.extract_strided_slice %63 {offsets = [0, 0], sizes = [32, 32], strides = [1, 1]} : vector<32x64xf32> to vector<32x32xf32>
    %65 = arith.negf %64 : vector<32x32xf32>
    %66 = math.exp %65 : vector<32x32xf32>
    %cst_22 = arith.constant 1.000000e+00 : f32
    %67 = vector.broadcast %cst_22 : f32 to vector<32x32xf32>
    %68 = arith.addf %67, %66 : vector<32x32xf32>
    %69 = arith.divf %67, %68 : vector<32x32xf32>
    %70 = vector.extract_strided_slice %63 {offsets = [0, 32], sizes = [32, 32], strides = [1, 1]} : vector<32x64xf32> to vector<32x32xf32>
    %71 = math.tanh %70 : vector<32x32xf32>
    %72 = arith.mulf %69, %71 : vector<32x32xf32>
    %73 = arith.truncf %72 : vector<32x32xf32> to vector<32x32xbf16>
    %cst_23 = arith.constant dense<0.000000e+00> : vector<2x32xf32>
    %74 = tpu.matmul %8, %73, %cst_23 {dimension_numbers = #tpu.dot_dimension_numbers<[1], [0], [0], [1], [0, 0, 1, 1], [], []>} : vector<2x32xbf16>, vector<32x32xbf16>, vector<2x32xf32> -> vector<2x32xf32>
    %75 = math.tanh %74 : vector<2x32xf32>
    %76 = arith.truncf %75 : vector<2x32xf32> to vector<2x32xbf16>
    %cst_24 = arith.constant dense<0.000000e+00> : vector<2x160xf32>
    %77 = tpu.matmul %76, %4, %cst_24 {dimension_numbers = #tpu.dot_dimension_numbers<[1], [0], [0], [1], [0, 0, 1, 1], [], []>} : vector<2x32xbf16>, vector<32x160xbf16>, vector<2x160xf32> -> vector<2x160xf32>
    %78 = vector.broadcast %14 : vector<1x160xf32> to vector<2x160xf32>
    %79 = arith.addf %77, %78 : vector<2x160xf32>
    %cst_25 = arith.constant 0.000000e+00 : f32
    %80 = vector.broadcast %cst_25 : f32 to vector<2x160xf32>
    %81 = arith.cmpf ogt, %79, %80 : vector<2x160xf32>
    %cst_26 = arith.constant 1.000000e-01 : f32
    %82 = vector.broadcast %cst_26 : f32 to vector<2x160xf32>
    %83 = arith.mulf %82, %79 : vector<2x160xf32>
    %84 = arith.select %81, %79, %83 : vector<2x160xi1>, vector<2x160xf32>
    %85 = arith.truncf %84 : vector<2x160xf32> to vector<2x160xbf16>
    %cst_27 = arith.constant dense<0.000000e+00> : vector<2x128xf32>
    %86 = tpu.matmul %85, %5, %cst_27 {dimension_numbers = #tpu.dot_dimension_numbers<[1], [0], [0], [1], [0, 0, 1, 1], [], []>} : vector<2x160xbf16>, vector<160x128xbf16>, vector<2x128xf32> -> vector<2x128xf32>
    %87 = vector.broadcast %15 : vector<1x128xf32> to vector<2x128xf32>
    %88 = arith.addf %86, %87 : vector<2x128xf32>
    %c0_28 = arith.constant 0 : index
    %c0_29 = arith.constant 0 : index
    %89 = vector.load %arg1[%c0_28, %c0_29] : memref<2x16xi32, #tpu.memory_space<vmem>>, vector<2x16xi32>
    %c0_i32 = arith.constant 0 : i32
    %90 = vector.broadcast %c0_i32 : i32 to vector<2x16xi32>
    %91 = arith.cmpi sgt, %89, %90 : vector<2x16xi32>
    %92 = arith.extui %91 : vector<2x16xi1> to vector<2x16xi32>
    %93 = arith.sitofp %92 : vector<2x16xi32> to vector<2x16xf32>
    %cst_30 = arith.constant 0.000000e+00 : f32
    %94 = vector.broadcast %cst_30 : f32 to vector<2x112xf32>
    %95 = tpu.concatenate %93, %94 in 1 : vector<2x16xf32>, vector<2x112xf32> -> vector<2x128xf32>
    %96 = tpu.iota {dimensions = array<i32: 1>} : vector<2x128xi32>
    %c25_i32 = arith.constant 25 : i32
    %97 = vector.broadcast %c25_i32 : i32 to vector<2x128xi32>
    %98 = arith.cmpi slt, %96, %97 : vector<2x128xi32>
    %cst_31 = arith.constant 1.000000e+00 : f32
    %99 = vector.broadcast %cst_31 : f32 to vector<2x128xf32>
    %100 = arith.subf %95, %99 : vector<2x128xf32>
    %cst_32 = arith.constant 1.000000e+04 : f32
    %101 = vector.broadcast %cst_32 : f32 to vector<2x128xf32>
    %102 = arith.mulf %100, %101 : vector<2x128xf32>
    %cst_33 = arith.constant 0.000000e+00 : f32
    %103 = vector.broadcast %cst_33 : f32 to vector<2x128xf32>
    %104 = arith.select %98, %102, %103 : vector<2x128xi1>, vector<2x128xf32>
    %105 = arith.addf %88, %104 : vector<2x128xf32>
    %106 = vector.extract_strided_slice %88 {offsets = [0, 86], sizes = [2, 16], strides = [1, 1]} : vector<2x128xf32> to vector<2x16xf32>
    %cst_34 = arith.constant 0.000000e+00 : f32
    %107 = vector.broadcast %cst_34 : f32 to vector<2x16xf32>
    %108 = arith.cmpf ogt, %106, %107 : vector<2x16xf32>
    %cst_35 = arith.constant 1.000000e-01 : f32
    %109 = vector.broadcast %cst_35 : f32 to vector<2x16xf32>
    %110 = arith.mulf %109, %106 : vector<2x16xf32>
    %111 = arith.select %108, %106, %110 : vector<2x16xi1>, vector<2x16xf32>
    %112 = vector.broadcast %16 : vector<1x16xf32> to vector<2x16xf32>
    %113 = arith.mulf %111, %112 : vector<2x16xf32>
    %cst_36 = arith.constant dense<0.000000e+00> : vector<2xf32>
    %114 = vector.multi_reduction <add>, %113, %cst_36 [1] : vector<2x16xf32> to vector<2xf32>
    %115 = vector.shape_cast %114 : vector<2xf32> to vector<2x1xf32>
    %116 = vector.broadcast %17 : vector<1x1xf32> to vector<2x1xf32>
    %117 = arith.addf %115, %116 : vector<2x1xf32>
    %c56_i32 = arith.constant 56 : i32
    %118 = vector.broadcast %c56_i32 : i32 to vector<2x128xi32>
    %119 = arith.cmpi slt, %96, %118 : vector<2x128xi32>
    %cst_37 = arith.constant 0.000000e+00 : f32
    %120 = vector.broadcast %cst_37 : f32 to vector<2x128xf32>
    %121 = arith.select %119, %105, %120 : vector<2x128xi1>, vector<2x128xf32>
    %c0_38 = arith.constant 0 : index
    %c0_39 = arith.constant 0 : index
    %122 = vector.load %arg4[%c0_38, %c0_39] : memref<2x128xf32, #tpu.memory_space<vmem>>, vector<2x128xf32>
    tpu.vector_store %arg4[%c0_38, %c0_39], %121 {strides = array<i32>} : memref<2x128xf32, #tpu.memory_space<vmem>>, vector<2x128xf32>,
    %c0_40 = arith.constant 0 : index
    %c55 = arith.constant 55 : index
    %123 = vector.load %arg4[%c0_40, %c55] : memref<2x128xf32, #tpu.memory_space<vmem>>, vector<2x1xf32>
    tpu.vector_store %arg4[%c0_40, %c55], %117 {strides = array<i32>} : memref<2x128xf32, #tpu.memory_space<vmem>>, vector<2x1xf32>,
    %124 = vector.extract_strided_slice %105 {offsets = [0, 0], sizes = [2, 25], strides = [1, 1]} : vector<2x128xf32> to vector<2x25xf32>
    %cst_41 = arith.constant dense<0xFF800000> : vector<2xf32>
    %125 = vector.multi_reduction <maximumf>, %124, %cst_41 [1] : vector<2x25xf32> to vector<2xf32>
    %126 = vector.shape_cast %125 : vector<2xf32> to vector<2x1xf32>
    %127 = vector.broadcast %126 : vector<2x1xf32> to vector<2x25xf32>
    %128 = arith.subf %124, %127 : vector<2x25xf32>
    %129 = math.exp %128 : vector<2x25xf32>
    %cst_42 = arith.constant dense<0.000000e+00> : vector<2xf32>
    %130 = vector.multi_reduction <add>, %129, %cst_42 [1] : vector<2x25xf32> to vector<2xf32>
    %131 = vector.shape_cast %130 : vector<2xf32> to vector<2x1xf32>
    %132 = tpu.reciprocal %131 {approx = true} : vector<2x1xf32> -> vector<2x1xf32>
    %133 = vector.broadcast %132 : vector<2x1xf32> to vector<2x25xf32>
    %134 = arith.mulf %129, %133 : vector<2x25xf32>
    %c0_43 = arith.constant 0 : index
    %c56 = arith.constant 56 : index
    %135 = vector.load %arg4[%c0_43, %c56] : memref<2x128xf32, #tpu.memory_space<vmem>>, vector<2x25xf32>
    tpu.vector_store %arg4[%c0_43, %c56], %134 {strides = array<i32>} : memref<2x128xf32, #tpu.memory_space<vmem>>, vector<2x25xf32>,
    %136 = vector.extract_strided_slice %105 {offsets = [0, 50], sizes = [2, 3], strides = [1, 1]} : vector<2x128xf32> to vector<2x3xf32>
    %cst_44 = arith.constant dense<0xFF800000> : vector<2xf32>
    %137 = vector.multi_reduction <maximumf>, %136, %cst_44 [1] : vector<2x3xf32> to vector<2xf32>
    %138 = vector.shape_cast %137 : vector<2xf32> to vector<2x1xf32>
    %139 = vector.broadcast %138 : vector<2x1xf32> to vector<2x3xf32>
    %140 = arith.subf %136, %139 : vector<2x3xf32>
    %141 = math.exp %140 : vector<2x3xf32>
    %cst_45 = arith.constant dense<0.000000e+00> : vector<2xf32>
    %142 = vector.multi_reduction <add>, %141, %cst_45 [1] : vector<2x3xf32> to vector<2xf32>
    %143 = vector.shape_cast %142 : vector<2xf32> to vector<2x1xf32>
    %144 = tpu.reciprocal %143 {approx = true} : vector<2x1xf32> -> vector<2x1xf32>
    %145 = vector.broadcast %144 : vector<2x1xf32> to vector<2x3xf32>
    %146 = arith.mulf %141, %145 : vector<2x3xf32>
    %c0_46 = arith.constant 0 : index
    %c81 = arith.constant 81 : index
    %147 = vector.load %arg4[%c0_46, %c81] : memref<2x128xf32, #tpu.memory_space<vmem>>, vector<2x3xf32>
    tpu.vector_store %arg4[%c0_46, %c81], %146 {strides = array<i32>} : memref<2x128xf32, #tpu.memory_space<vmem>>, vector<2x3xf32>,
    %148 = vector.extract_strided_slice %105 {offsets = [0, 53], sizes = [2, 2], strides = [1, 1]} : vector<2x128xf32> to vector<2x2xf32>
    %cst_47 = arith.constant dense<0xFF800000> : vector<2xf32>
    %149 = vector.multi_reduction <maximumf>, %148, %cst_47 [1] : vector<2x2xf32> to vector<2xf32>
    %150 = vector.shape_cast %149 : vector<2xf32> to vector<2x1xf32>
    %151 = vector.broadcast %150 : vector<2x1xf32> to vector<2x2xf32>
    %152 = arith.subf %148, %151 : vector<2x2xf32>
    %153 = math.exp %152 : vector<2x2xf32>
    %cst_48 = arith.constant dense<0.000000e+00> : vector<2xf32>
    %154 = vector.multi_reduction <add>, %153, %cst_48 [1] : vector<2x2xf32> to vector<2xf32>
    %155 = vector.shape_cast %154 : vector<2xf32> to vector<2x1xf32>
    %156 = tpu.reciprocal %155 {approx = true} : vector<2x1xf32> -> vector<2x1xf32>
    %157 = vector.broadcast %156 : vector<2x1xf32> to vector<2x2xf32>
    %158 = arith.mulf %153, %157 : vector<2x2xf32>
    %c0_49 = arith.constant 0 : index
    %c84 = arith.constant 84 : index
    %159 = vector.load %arg4[%c0_49, %c84] : memref<2x128xf32, #tpu.memory_space<vmem>>, vector<2x2xf32>
    tpu.vector_store %arg4[%c0_49, %c84], %158 {strides = array<i32>} : memref<2x128xf32, #tpu.memory_space<vmem>>, vector<2x2xf32>,
    return
  }
}

</mosaic_0001>

<llo_original>
// kernel: forward.3
$region0: #{forward.3}
  #allocation0 [shape = 'u32[]', space=smem, size = 0x4, offset = 0x4, fixed_abs, tag = 'smem constant byte address 0x4 - core index']
  #allocation1 [shape = 'u32[144,128]{1,0:T(1,128)}', space=vmem, size = 0x12000, scoped, tag = 'internal scratch']
  %s0 = inlined_call_operand.vmem [shape: s32[32,1], index: 0, kind: input, shape index: {}]
  %s1 = inlined_call_operand.vmem [shape: s32[2,16], index: 1, kind: input, shape index: {}]
  %s2 = inlined_call_operand.vmem [shape: f32[2,3,16,16], index: 2, kind: input, shape index: {}]
  %s3 = inlined_call_operand.vmem [shape: bf16[320,160], index: 3, kind: input, shape index: {}]
  %s4 = inlined_call_operand.vmem [shape: f32[2,128], index: 4, kind: output, shape index: {}]
  %s5 = sld [smem:[#allocation0]]
  $region26: #{forward.3} parent=0
    _
  %s7 = ssub.s32 1, %s5
  %s8 = scalar_select 0, %s7, %s5
  // Predicated region
  $region2: #{forward.3} parent=0 // pred_check
    _
  $region3: #{forward.3} parent=0 // pred_check_branch
    %10 = sbr.rel (0) target = $region5
  $region4: #{forward.3} parent=0 // pred_region
    _
  $region5: #{forward.3} parent=0 // pred_fallthru
    _
  // Predicated region
  $region6: #{forward.3} parent=0 // pred_check
    _
  $region7: #{forward.3} parent=0 // pred_check_branch
    %12 = sbr.rel (0) target = $region9
  $region8: #{forward.3} parent=0 // pred_region
    _
  $region9: #{forward.3} parent=0 // pred_fallthru
    _
  // Predicated region
  $region10: #{forward.3} parent=0 // pred_check
    _
  $region11: #{forward.3} parent=0 // pred_check_branch
    %14 = sbr.rel (0) target = $region13
  $region12: #{forward.3} parent=0 // pred_region
    _
  $region13: #{forward.3} parent=0 // pred_fallthru
    _
  // Predicated region
  $region14: #{forward.3} parent=0 // pred_check
    _
  $region15: #{forward.3} parent=0 // pred_check_branch
    %16 = sbr.rel (0) target = $region17
  $region16: #{forward.3} parent=0 // pred_region
    _
  $region17: #{forward.3} parent=0 // pred_fallthru
    _
  %v18 = vld [vmem:[%s2] sm:$0xff]
  %v19 = vld [vmem:[%s2 + $0x8] sm:$0xff]
  %v20 = vld [vmem:[%s2 + $0x10] sm:$0xff]
  %v21 = vld [vmem:[%s2 + $0x18] sm:$0xff]
  %v22 = vld [vmem:[%s2 + $0x20] sm:$0xff]
  %v23 = vld [vmem:[%s2 + $0x28] sm:$0xff]
  %v24 = vld [vmem:[%s2 + $0x30] sm:$0xff]
  %v25 = vld [vmem:[%s2 + $0x38] sm:$0xff]
  %v26 = vld [vmem:[%s2 + $0x40] sm:$0xff]
  %v27 = vld [vmem:[%s2 + $0x48] sm:$0xff]
  %v28 = vld [vmem:[%s2 + $0x50] sm:$0xff]
  %v29 = vld [vmem:[%s2 + $0x58] sm:$0xff]
  %v30 = vld [vmem:[%s3] sm:$0xf]
  %v31 = vld [vmem:[%s3 + $0x8] sm:$0x1]
  %v32 = vld [vmem:[%s3 + $0x10] sm:$0xf]
  %v33 = vld [vmem:[%s3 + $0x18] sm:$0xf]
  %v34 = vld [vmem:[%s3 + $0x20] sm:$0xf]
  %v35 = vld [vmem:[%s3 + $0x28] sm:$0xf]
  %v36 = vld [vmem:[%s3 + $0x30] sm:$0xf]
  %v37 = vld [vmem:[%s3 + $0x38] sm:$0xf]
  %v38 = vld [vmem:[%s3 + $0x40] sm:$0xf]
  %v39 = vld [vmem:[%s3 + $0x48] sm:$0x1]
  %v40 = vld [vmem:[%s3 + $0x50] sm:$0xff]
  %v41 = vld [vmem:[%s3 + $0x58] sm:$0xff]
  %v42 = vld [vmem:[%s3 + $0x60] sm:$0xff]
  %v43 = vld [vmem:[%s3 + $0x68] sm:$0xff]
  %v44 = vld [vmem:[%s3 + $0x70] sm:$0xf]
  %v45 = vld [vmem:[%s3 + $0x78] sm:$0xf]
  %v46 = vld [vmem:[%s3 + $0x80] sm:$0xf]
  %v47 = vld [vmem:[%s3 + $0x88] sm:$0xf]
  %v48 = vld [vmem:[%s3 + $0x90] sm:$0xf]
  %v49 = vld [vmem:[%s3 + $0x98] sm:$0xf]
  %v50 = vld [vmem:[%s3 + $0xa0] sm:$0xf]
  %v51 = vld [vmem:[%s3 + $0xa8] sm:$0xf]
  %v52 = vld [vmem:[%s3 + $0xb0] sm:$0xf]
  %v53 = vld [vmem:[%s3 + $0xb8] sm:$0xf]
  %v54 = vld [vmem:[%s3 + $0xc0] sm:$0xf]
  %v55 = vld [vmem:[%s3 + $0xc8] sm:$0xf]
  %v56 = vld [vmem:[%s3 + $0xd0] sm:$0xf]
  %v57 = vld [vmem:[%s3 + $0xd8] sm:$0xf]
  %v58 = vld [vmem:[%s3 + $0xe0] sm:$0xf]
  %v59 = vld [vmem:[%s3 + $0xe8] sm:$0xf]
  %v60 = vld [vmem:[%s3 + $0xf0] sm:$0xf]
  %v61 = vld [vmem:[%s3 + $0xf8] sm:$0xf]
  %v62 = vld [vmem:[%s3 + $0x100] sm:$0xf]
  %v63 = vld [vmem:[%s3 + $0x108] sm:$0xf]
  %v64 = vld [vmem:[%s3 + $0x110] sm:$0xf]
  %v65 = vld [vmem:[%s3 + $0x118] sm:$0xf]
  %v66 = vunpack.c.l.bf16 %v64
  %v67 = vunpack.c.l.bf16 %v65
  %v68 = vld [vmem:[%s3 + $0x120] sm:$0x1]
  %v69 = vld [vmem:[%s3 + $0x130] sm:$0xff]
  %v70 = vunpack.c.l.bf16 %v69
  %v71 = vunpack.c.h.bf16 %v69
  %v72 = vld [vmem:[%s0] sm:$0xff]
  %v73 = vld [vmem:[%s0 + $0x8] sm:$0xff]
  %v74 = vld [vmem:[%s0 + $0x10] sm:$0xff]
  %v75 = vld [vmem:[%s0 + $0x18] sm:$0xff]
  %v76 = vlaneseq
  %v77 = vand.u32 %v76, 127
  %78 = vset.pattern.permute.xlu0 0
  %79 = vperm.xlu0 %78, %v72
  %v80 = vpop.permute.xlu0 %79
  %81 = vset.pattern.permute.xlu0 0
  %82 = vperm.xlu0 %81, %v73
  %v83 = vpop.permute.xlu0 %82
  %84 = vset.pattern.permute.xlu0 0
  %85 = vperm.xlu0 %84, %v74
  %v86 = vpop.permute.xlu0 %85
  %87 = vset.pattern.permute.xlu0 0
  %88 = vperm.xlu0 %87, %v75
  %v89 = vpop.permute.xlu0 %88
  %vm90 = vcmp.eq.s32.totalorder %v77, %v80
  %vm91 = vcmp.eq.s32.totalorder %v77, %v83
  %vm92 = vcmp.eq.s32.totalorder %v77, %v86
  %vm93 = vcmp.eq.s32.totalorder %v77, %v89
  %v94 = vsel %vm90, 1, 0
  %v95 = vsel %vm91, 1, 0
  %v96 = vsel %vm92, 1, 0
  %v97 = vsel %vm93, 1, 0
  %v98 = vcvt.s32.f32 %v94
  %v99 = vcvt.s32.f32 %v95
  %v100 = vcvt.s32.f32 %v96
  %v101 = vcvt.s32.f32 %v97
  %vm102 = vcmask 130048
  %v103 = vsel %vm102, %v18, 0.0
  %104 = vadd.xlane.f32.xlu0 %v103
  %v105 = vpop.xlane.xlu0 %104
  %v106 = vsel %vm102, %v19, 0.0
  %107 = vadd.xlane.f32.xlu0 %v106
  %v108 = vpop.xlane.xlu0 %107
  %v109 = vsel %vm102, %v20, 0.0
  %110 = vadd.xlane.f32.xlu0 %v109
  %v111 = vpop.xlane.xlu0 %110
  %v112 = vsel %vm102, %v21, 0.0
  %113 = vadd.xlane.f32.xlu0 %v112
  %v114 = vpop.xlane.xlu0 %113
  %v115 = vsel %vm102, %v22, 0.0
  %116 = vadd.xlane.f32.xlu0 %v115
  %v117 = vpop.xlane.xlu0 %116
  %v118 = vsel %vm102, %v23, 0.0
  %119 = vadd.xlane.f32.xlu0 %v118
  %v120 = vpop.xlane.xlu0 %119
  %v121 = vsel %vm102, %v24, 0.0
  %122 = vadd.xlane.f32.xlu0 %v121
  %v123 = vpop.xlane.xlu0 %122
  %v124 = vsel %vm102, %v25, 0.0
  %125 = vadd.xlane.f32.xlu0 %v124
  %v126 = vpop.xlane.xlu0 %125
  %v127 = vsel %vm102, %v26, 0.0
  %128 = vadd.xlane.f32.xlu0 %v127
  %v129 = vpop.xlane.xlu0 %128
  %v130 = vsel %vm102, %v27, 0.0
  %131 = vadd.xlane.f32.xlu0 %v130
  %v132 = vpop.xlane.xlu0 %131
  %v133 = vsel %vm102, %v28, 0.0
  %134 = vadd.xlane.f32.xlu0 %v133
  %v135 = vpop.xlane.xlu0 %134
  %v136 = vsel %vm102, %v29, 0.0
  %137 = vadd.xlane.f32.xlu0 %v136
  %v138 = vpop.xlane.xlu0 %137
  %v139 = vadd.f32 %v105, 1.0
  %v140 = vadd.f32 %v108, 1.0
  %v141 = vadd.f32 %v111, 1.0
  %v142 = vadd.f32 %v114, 1.0
  %v143 = vadd.f32 %v117, 1.0
  %v144 = vadd.f32 %v120, 1.0
  %v145 = vadd.f32 %v123, 1.0
  %v146 = vadd.f32 %v126, 1.0
  %v147 = vadd.f32 %v129, 1.0
  %v148 = vadd.f32 %v132, 1.0
  %v149 = vadd.f32 %v135, 1.0
  %v150 = vadd.f32 %v138, 1.0
  %v151 = vrcp.pop %v139
  %v152 = vrcp.pop %v140
  %v153 = vrcp.pop %v141
  %v154 = vrcp.pop %v142
  %v155 = vrcp.pop %v143
  %v156 = vrcp.pop %v144
  %v157 = vrcp.pop %v145
  %v158 = vrcp.pop %v146
  %v159 = vrcp.pop %v147
  %v160 = vrcp.pop %v148
  %v161 = vrcp.pop %v149
  %v162 = vrcp.pop %v150
  %v163 = vmul.f32 %v18, %v151
  %v164 = vmul.f32 %v19, %v152
  %v165 = vmul.f32 %v20, %v153
  %v166 = vmul.f32 %v21, %v154
  %v167 = vmul.f32 %v22, %v155
  %v168 = vmul.f32 %v23, %v156
  %v169 = vmul.f32 %v24, %v157
  %v170 = vmul.f32 %v25, %v158
  %v171 = vmul.f32 %v26, %v159
  %v172 = vmul.f32 %v27, %v160
  %v173 = vmul.f32 %v28, %v161
  %v174 = vmul.f32 %v29, %v162
  %v175 = vsel %vm102, %v163, 0.0
  %v176 = vsel %vm102, %v165, 0.0
  %v177 = vadd.f32 %v175, %v176
  %v178 = vsel %vm102, %v167, 0.0
  %v179 = vadd.f32 %v177, %v178
  %v180 = vsel %vm102, %v164, 0.0
  %v181 = vsel %vm102, %v166, 0.0
  %v182 = vadd.f32 %v180, %v181
  %v183 = vsel %vm102, %v168, 0.0
  %v184 = vadd.f32 %v182, %v183
  %v185 = vsel %vm102, %v169, 0.0
  %v186 = vsel %vm102, %v171, 0.0
  %v187 = vadd.f32 %v185, %v186
  %v188 = vsel %vm102, %v173, 0.0
  %v189 = vadd.f32 %v187, %v188
  %v190 = vsel %vm102, %v170, 0.0
  %v191 = vsel %vm102, %v172, 0.0
  %v192 = vadd.f32 %v190, %v191
  %v193 = vsel %vm102, %v174, 0.0
  %v194 = vadd.f32 %v192, %v193
  %v195 = vadd.f32 %v179, %v66
  %v196 = vadd.f32 %v184, %v67
  %v197 = vadd.f32 %v189, %v66
  %v198 = vadd.f32 %v194, %v67
  %v199 = vsel %vm102, %v195, 0.0
  %v200 = vsel %vm102, %v196, 0.0
  %203 = vrot.lane.b32.xlu0 %v197, 16
  %v204 = vpop.permute.xlu0 %203
  %205 = vrot.lane.b32.xlu0 %v198, 16
  %v206 = vpop.permute.xlu0 %205
  %v209 = vsel %vm102, 0.0, %v204
  %v210 = vsel %vm102, 0.0, %v206
  %v211 = vpack.c.bf16 %v99, %v98
  %v212 = vpack.c.bf16 %v101, %v100
  %v213 = vlaneseq
  %v214 = vshrl.u32 %v213, 7
  %v215 = vsub.s32 0, %v214
  %v216 = vrot.slane %v70, %v215
  %v219 = vunpack.c.l.b16 %v30
  %v220 = vunpack.c.l.b16 %v31
  %v221 = vpack.c.b16 %v220, %v219
  %vm222 = vcmask 80896
  %v224 = vsel %vm222, %v211, 0
  %v227 = vsel %vm222, %v212, 0
  %vm229 = vcmask 1044480
  %v231 = vsel %vm229, %v221, 0
  %233 = vmatprep.subr.bf16.mxu0 0
  %234 = vmatpush1.bf16.msra.mxu0 %v231
  %235 = vmatprep.subr.bf16.mxu0 0
  %236 = vmatpush1.bf16.msra.mxu0 0
  %237 = vmatprep.subr.bf16.mxu0 0
  %238 = vmatpush1.bf16.msra.mxu0 0
  %239 = vmatprep.subr.bf16.mxu0 0
  %240 = vmatpush1.bf16.msra.mxu0 0
  %241 = vmatprep.subr.bf16.mxu0 0
  %242 = vmatpush1.bf16.msra.mxu0 0
  %243 = vmatprep.subr.bf16.mxu0 0
  %244 = vmatpush1.bf16.msra.mxu0 0
  %245 = vmatprep.subr.bf16.mxu0 0
  %246 = vmatpush1.bf16.msra.mxu0 0
  %247 = vmatprep.subr.bf16.mxu0 0
  %248 = vmatpush1.bf16.msra.mxu0 0
  %249 = vmatprep.subr.bf16.mxu0 0
  %250 = vmatpush1.bf16.msra.mxu0 0
  %251 = vmatprep.subr.bf16.mxu0 0
  %252 = vmatpush1.bf16.msra.mxu0 0
  %253 = vmatprep.subr.bf16.mxu0 0
  %254 = vmatpush1.bf16.msra.mxu0 0
  %255 = vmatprep.subr.bf16.mxu0 0
  %256 = vmatpush1.bf16.msra.mxu0 0
  %257 = vmatprep.subr.bf16.mxu0 0
  %258 = vmatpush1.bf16.msra.mxu0 0
  %259 = vmatprep.subr.bf16.mxu0 0
  %260 = vmatpush1.bf16.msra.mxu0 0
  %261 = vmatprep.subr.bf16.mxu0 0
  %262 = vmatpush1.bf16.msra.mxu0 0
  %263 = vmatprep.subr.bf16.mxu0 0
  %264 = vmatpush1.bf16.msra.mxu0 0
  %265 = vmatprep.mubr.bf16.mxu0 0
  %266 = vmatmul.mubr.bf16.gmra.mrb[0].mxu0 %v224
  %v267 = vpop.f32.mrb[0].mxu0
  %v268 = vadd.f32 %v216, %v267
  %v269 = vpop.f32.mrb[0].mxu0
  %v270 = vpop.f32.mrb[0].mxu0
  %v271 = vadd.f32 %v216, %v270
  %v272 = vpop.f32.mrb[0].mxu0
  %273 = vmatprep.mubr.bf16.mxu0 0
  %274 = vmatmul.mubr.bf16.gmra.mrb[0].mxu0 %v227
  %v275 = vpop.f32.mrb[0].mxu0
  %v276 = vadd.f32 %v216, %v275
  %v277 = vpop.f32.mrb[0].mxu0
  %v278 = vpop.f32.mrb[0].mxu0
  %v279 = vadd.f32 %v216, %v278
  %v280 = vpop.f32.mrb[0].mxu0
  %281 = vdwg.mxu0
  %v282 = vpack.c.bf16 %v200, %v199
  %v283 = vpack.c.bf16 %v210, %v209
  %v284 = vpack.c.bf16 %v271, %v268
  %v285 = vpack.c.bf16 %v279, %v276
  %vm286 = vcmask 261120
  %v288 = vsel %vm286, %v282, 0
  %v291 = vsel %vm286, %v283, 0
  %293 = vmatprep.subr.bf16.mxu0 0
  %294 = vmatpush1.bf16.msra.mxu0 %v284
  %295 = vmatprep.subr.bf16.mxu0 0
  %296 = vmatpush1.bf16.msra.mxu0 %v285
  %297 = vmatprep.subr.bf16.mxu0 0
  %298 = vmatpush1.bf16.msra.mxu0 0
  %299 = vmatprep.subr.bf16.mxu0 0
  %300 = vmatpush1.bf16.msra.mxu0 0
  %301 = vmatprep.subr.bf16.mxu0 0
  %302 = vmatpush1.bf16.msra.mxu0 0
  %303 = vmatprep.subr.bf16.mxu0 0
  %304 = vmatpush1.bf16.msra.mxu0 0
  %305 = vmatprep.subr.bf16.mxu0 0
  %306 = vmatpush1.bf16.msra.mxu0 0
  %307 = vmatprep.subr.bf16.mxu0 0
  %308 = vmatpush1.bf16.msra.mxu0 0
  %309 = vmatprep.subr.bf16.mxu0 0
  %310 = vmatpush1.bf16.msra.mxu0 0
  %311 = vmatprep.subr.bf16.mxu0 0
  %312 = vmatpush1.bf16.msra.mxu0 0
  %313 = vmatprep.subr.bf16.mxu0 0
  %314 = vmatpush1.bf16.msra.mxu0 0
  %315 = vmatprep.subr.bf16.mxu0 0
  %316 = vmatpush1.bf16.msra.mxu0 0
  %317 = vmatprep.subr.bf16.mxu0 0
  %318 = vmatpush1.bf16.msra.mxu0 0
  %319 = vmatprep.subr.bf16.mxu0 0
  %320 = vmatpush1.bf16.msra.mxu0 0
  %321 = vmatprep.subr.bf16.mxu0 0
  %322 = vmatpush1.bf16.msra.mxu0 0
  %323 = vmatprep.subr.bf16.mxu0 0
  %324 = vmatpush1.bf16.msra.mxu0 0
  %325 = vmatprep.mubr.bf16.mxu0 0
  %326 = vmatmul.mubr.bf16.gmra.mrb[0].mxu0 %v288
  %v327 = vpop.f32.mrb[0].mxu0
  %v328 = vadd.f32 0.0, %v327
  %v329 = vpop.f32.mrb[0].mxu0
  %v330 = vpop.f32.mrb[0].mxu0
  %v331 = vadd.f32 0.0, %v330
  %v332 = vpop.f32.mrb[0].mxu0
  %333 = vmatprep.mubr.bf16.mxu0 0
  %334 = vmatmul.mubr.bf16.gmra.mrb[0].mxu0 %v291
  %v335 = vpop.f32.mrb[0].mxu0
  %v336 = vadd.f32 0.0, %v335
  %v337 = vpop.f32.mrb[0].mxu0
  %v338 = vpop.f32.mrb[0].mxu0
  %v339 = vadd.f32 0.0, %v338
  %v340 = vpop.f32.mrb[0].mxu0
  %341 = vdwg.mxu0
  %v342 = vtanh.pop %v328
  %v343 = vtanh.pop %v331
  %v344 = vtanh.pop %v336
  %v345 = vtanh.pop %v339
  %v346 = vpack.c.bf16 %v343, %v342
  %v347 = vpack.c.bf16 %v345, %v344
  %v348 = vlaneseq
  %v349 = vshrl.u32 %v348, 7
  %v350 = vsub.s32 1, %v349
  %v351 = vrot.slane %v70, %v350
  %v356 = vunpack.c.l.b16 %v32
  %v357 = vunpack.c.l.b16 %v33
  %v358 = vunpack.c.l.b16 %v34
  %v359 = vunpack.c.l.b16 %v35
  %v360 = vpack.c.b16 %v357, %v356
  %v361 = vpack.c.b16 %v359, %v358
  %v365 = vsel %vm286, %v346, 0
  %v368 = vsel %vm286, %v347, 0
  %370 = vmatprep.subr.bf16.mxu0 0
  %371 = vmatpush1.bf16.msra.mxu0 %v360
  %372 = vmatprep.subr.bf16.mxu0 0
  %373 = vmatpush1.bf16.msra.mxu0 %v361
  %374 = vmatprep.subr.bf16.mxu0 0
  %375 = vmatpush1.bf16.msra.mxu0 0
  %376 = vmatprep.subr.bf16.mxu0 0
  %377 = vmatpush1.bf16.msra.mxu0 0
  %378 = vmatprep.subr.bf16.mxu0 0
  %379 = vmatpush1.bf16.msra.mxu0 0
  %380 = vmatprep.subr.bf16.mxu0 0
  %381 = vmatpush1.bf16.msra.mxu0 0
  %382 = vmatprep.subr.bf16.mxu0 0
  %383 = vmatpush1.bf16.msra.mxu0 0
  %384 = vmatprep.subr.bf16.mxu0 0
  %385 = vmatpush1.bf16.msra.mxu0 0
  %386 = vmatprep.subr.bf16.mxu0 0
  %387 = vmatpush1.bf16.msra.mxu0 0
  %388 = vmatprep.subr.bf16.mxu0 0
  %389 = vmatpush1.bf16.msra.mxu0 0
  %390 = vmatprep.subr.bf16.mxu0 0
  %391 = vmatpush1.bf16.msra.mxu0 0
  %392 = vmatprep.subr.bf16.mxu0 0
  %393 = vmatpush1.bf16.msra.mxu0 0
  %394 = vmatprep.subr.bf16.mxu0 0
  %395 = vmatpush1.bf16.msra.mxu0 0
  %396 = vmatprep.subr.bf16.mxu0 0
  %397 = vmatpush1.bf16.msra.mxu0 0
  %398 = vmatprep.subr.bf16.mxu0 0
  %399 = vmatpush1.bf16.msra.mxu0 0
  %400 = vmatprep.subr.bf16.mxu0 0
  %401 = vmatpush1.bf16.msra.mxu0 0
  %402 = vmatprep.mubr.bf16.mxu0 0
  %403 = vmatmul.mubr.bf16.gmra.mrb[0].mxu0 %v365
  %v404 = vpop.f32.mrb[0].mxu0
  %v405 = vadd.f32 %v351, %v404
  %v406 = vpop.f32.mrb[0].mxu0
  %v407 = vpop.f32.mrb[0].mxu0
  %v408 = vadd.f32 %v351, %v407
  %v409 = vpop.f32.mrb[0].mxu0
  %410 = vmatprep.mubr.bf16.mxu0 0
  %411 = vmatmul.mubr.bf16.gmra.mrb[0].mxu0 %v368
  %v412 = vpop.f32.mrb[0].mxu0
  %v413 = vadd.f32 %v351, %v412
  %v414 = vpop.f32.mrb[0].mxu0
  %v415 = vpop.f32.mrb[0].mxu0
  %v416 = vadd.f32 %v351, %v415
  %v417 = vpop.f32.mrb[0].mxu0
  %418 = vdwg.mxu0
  %v419 = vpack.c.bf16 %v408, %v405
  %v420 = vpack.c.bf16 %v416, %v413
  %421 = vmatprep.subr.bf16.mxu0 0
  %422 = vmatpush1.bf16.msra.mxu0 %v419
  %423 = vmatprep.subr.bf16.mxu0 0
  %424 = vmatpush1.bf16.msra.mxu0 %v420
  %425 = vmatprep.subr.bf16.mxu0 0
  %426 = vmatpush1.bf16.msra.mxu0 0
  %427 = vmatprep.subr.bf16.mxu0 0
  %428 = vmatpush1.bf16.msra.mxu0 0
  %429 = vmatprep.subr.bf16.mxu0 0
  %430 = vmatpush1.bf16.msra.mxu0 0
  %431 = vmatprep.subr.bf16.mxu0 0
  %432 = vmatpush1.bf16.msra.mxu0 0
  %433 = vmatprep.subr.bf16.mxu0 0
  %434 = vmatpush1.bf16.msra.mxu0 0
  %435 = vmatprep.subr.bf16.mxu0 0
  %436 = vmatpush1.bf16.msra.mxu0 0
  %437 = vmatprep.subr.bf16.mxu0 0
  %438 = vmatpush1.bf16.msra.mxu0 0
  %439 = vmatprep.subr.bf16.mxu0 0
  %440 = vmatpush1.bf16.msra.mxu0 0
  %441 = vmatprep.subr.bf16.mxu0 0
  %442 = vmatpush1.bf16.msra.mxu0 0
  %443 = vmatprep.subr.bf16.mxu0 0
  %444 = vmatpush1.bf16.msra.mxu0 0
  %445 = vmatprep.subr.bf16.mxu0 0
  %446 = vmatpush1.bf16.msra.mxu0 0
  %447 = vmatprep.subr.bf16.mxu0 0
  %448 = vmatpush1.bf16.msra.mxu0 0
  %449 = vmatprep.subr.bf16.mxu0 0
  %450 = vmatpush1.bf16.msra.mxu0 0
  %451 = vmatprep.subr.bf16.mxu0 0
  %452 = vmatpush1.bf16.msra.mxu0 0
  %453 = vmatprep.mubr.bf16.mxu0 0
  %454 = vmatmul.mubr.bf16.gmra.mrb[0].mxu0 %v288
  %v455 = vpop.f32.mrb[0].mxu0
  %v456 = vadd.f32 0.0, %v455
  %v457 = vpop.f32.mrb[0].mxu0
  %v458 = vpop.f32.mrb[0].mxu0
  %v459 = vadd.f32 0.0, %v458
  %v460 = vpop.f32.mrb[0].mxu0
  %461 = vmatprep.mubr.bf16.mxu0 0
  %462 = vmatmul.mubr.bf16.gmra.mrb[0].mxu0 %v291
  %v463 = vpop.f32.mrb[0].mxu0
  %v464 = vadd.f32 0.0, %v463
  %v465 = vpop.f32.mrb[0].mxu0
  %v466 = vpop.f32.mrb[0].mxu0
  %v467 = vadd.f32 0.0, %v466
  %v468 = vpop.f32.mrb[0].mxu0
  %469 = vdwg.mxu0
  %v470 = vtanh.pop %v456
  %v471 = vtanh.pop %v459
  %v472 = vtanh.pop %v464
  %v473 = vtanh.pop %v467
  %478 = vrot.lane.b32.xlu0 %v98, 16
  %v479 = vpop.permute.xlu0 %478
  %480 = vrot.lane.b32.xlu0 %v99, 16
  %v481 = vpop.permute.xlu0 %480
  %482 = vrot.lane.b32.xlu0 %v100, 16
  %v483 = vpop.permute.xlu0 %482
  %484 = vrot.lane.b32.xlu0 %v101, 16
  %v485 = vpop.permute.xlu0 %484
  %v490 = vsel %vm102, %v470, %v479
  %v491 = vsel %vm102, %v471, %v481
  %v492 = vsel %vm102, %v472, %v483
  %v493 = vsel %vm102, %v473, %v485
  %v494 = vpack.c.bf16 %v491, %v490
  %v495 = vpack.c.bf16 %v493, %v492
  %v496 = vlaneseq
  %v497 = vshrl.u32 %v496, 7
  %v498 = vsub.s32 2, %v497
  %v499 = vrot.slane %v70, %v498
  %v504 = vunpack.c.l.b16 %v36
  %v505 = vunpack.c.l.b16 %v37
  %v506 = vunpack.c.l.b16 %v38
  %v507 = vunpack.c.l.b16 %v39
  %v508 = vpack.c.b16 %v505, %v504
  %v509 = vpack.c.b16 %v507, %v506
  %vm511 = vcmask 211968
  %v513 = vsel %vm511, %v494, 0
  %v516 = vsel %vm511, %v495, 0
  %v519 = vsel %vm229, %v509, 0
  %521 = vmatprep.subr.bf16.mxu0 0
  %522 = vmatpush1.bf16.msra.mxu0 %v508
  %523 = vmatprep.subr.bf16.mxu0 0
  %524 = vmatpush1.bf16.msra.mxu0 %v519
  %525 = vmatprep.subr.bf16.mxu0 0
  %526 = vmatpush1.bf16.msra.mxu0 0
  %527 = vmatprep.subr.bf16.mxu0 0
  %528 = vmatpush1.bf16.msra.mxu0 0
  %529 = vmatprep.subr.bf16.mxu0 0
  %530 = vmatpush1.bf16.msra.mxu0 0
  %531 = vmatprep.subr.bf16.mxu0 0
  %532 = vmatpush1.bf16.msra.mxu0 0
  %533 = vmatprep.subr.bf16.mxu0 0
  %534 = vmatpush1.bf16.msra.mxu0 0
  %535 = vmatprep.subr.bf16.mxu0 0
  %536 = vmatpush1.bf16.msra.mxu0 0
  %537 = vmatprep.subr.bf16.mxu0 0
  %538 = vmatpush1.bf16.msra.mxu0 0
  %539 = vmatprep.subr.bf16.mxu0 0
  %540 = vmatpush1.bf16.msra.mxu0 0
  %541 = vmatprep.subr.bf16.mxu0 0
  %542 = vmatpush1.bf16.msra.mxu0 0
  %543 = vmatprep.subr.bf16.mxu0 0
  %544 = vmatpush1.bf16.msra.mxu0 0
  %545 = vmatprep.subr.bf16.mxu0 0
  %546 = vmatpush1.bf16.msra.mxu0 0
  %547 = vmatprep.subr.bf16.mxu0 0
  %548 = vmatpush1.bf16.msra.mxu0 0
  %549 = vmatprep.subr.bf16.mxu0 0
  %550 = vmatpush1.bf16.msra.mxu0 0
  %551 = vmatprep.subr.bf16.mxu0 0
  %552 = vmatpush1.bf16.msra.mxu0 0
  %553 = vmatprep.mubr.bf16.mxu0 0
  %554 = vmatmul.mubr.bf16.gmra.mrb[0].mxu0 %v513
  %v555 = vpop.f32.mrb[0].mxu0
  %v556 = vadd.f32 %v499, %v555
  %v557 = vpop.f32.mrb[0].mxu0
  %v558 = vpop.f32.mrb[0].mxu0
  %v559 = vadd.f32 %v499, %v558
  %v560 = vpop.f32.mrb[0].mxu0
  %561 = vmatprep.mubr.bf16.mxu0 0
  %562 = vmatmul.mubr.bf16.gmra.mrb[0].mxu0 %v516
  %v563 = vpop.f32.mrb[0].mxu0
  %v564 = vadd.f32 %v499, %v563
  %v565 = vpop.f32.mrb[0].mxu0
  %v566 = vpop.f32.mrb[0].mxu0
  %v567 = vadd.f32 %v499, %v566
  %v568 = vpop.f32.mrb[0].mxu0
  %569 = vdwg.mxu0
  %v570 = vxor.u32 %v556, 2147483648
  %v571 = vxor.u32 %v559, 2147483648
  %v572 = vxor.u32 %v564, 2147483648
  %v573 = vxor.u32 %v567, 2147483648
  %v574 = vmul.f32 %v570, 1.442695
  %v575 = vpow.pop %v574
  %v576 = vmul.f32 %v571, 1.442695
  %v577 = vpow.pop %v576
  %v578 = vmul.f32 %v572, 1.442695
  %v579 = vpow.pop %v578
  %v580 = vmul.f32 %v573, 1.442695
  %v581 = vpow.pop %v580
  %v582 = vadd.f32 %v575, 1.0
  %v583 = vadd.f32 %v577, 1.0
  %v584 = vadd.f32 %v579, 1.0
  %v585 = vadd.f32 %v581, 1.0
  %v586 = vrcp.pop %v582
  %v587 = vmul.f32 1.0, %v586
  %v588 = vrcp.pop %v583
  %v589 = vmul.f32 1.0, %v588
  %v590 = vrcp.pop %v584
  %v591 = vmul.f32 1.0, %v590
  %v592 = vrcp.pop %v585
  %v593 = vmul.f32 1.0, %v592
  %v594 = vtanh.pop %v556
  %v595 = vtanh.pop %v559
  %v596 = vtanh.pop %v564
  %v597 = vtanh.pop %v567
  %602 = vrot.lane.b32.xlu0 %v594, 96
  %v603 = vpop.permute.xlu0 %602
  %604 = vrot.lane.b32.xlu0 %v595, 96
  %v605 = vpop.permute.xlu0 %604
  %606 = vrot.lane.b32.xlu0 %v596, 96
  %v607 = vpop.permute.xlu0 %606
  %608 = vrot.lane.b32.xlu0 %v597, 96
  %v609 = vpop.permute.xlu0 %608
  %v614 = vmul.f32 %v587, %v603
  %v615 = vmul.f32 %v589, %v605
  %v616 = vmul.f32 %v591, %v607
  %v617 = vmul.f32 %v593, %v609
  %v618 = vpack.c.bf16 %v615, %v614
  %v619 = vpack.c.bf16 %v617, %v616
  %v621 = vsel %vm286, %v68, 0
  %623 = vmatprep.subr.bf16.mxu0 0
  %624 = vmatpush1.bf16.msra.mxu0 %v618
  %625 = vmatprep.subr.bf16.mxu0 0
  %626 = vmatpush1.bf16.msra.mxu0 %v619
  %627 = vmatprep.subr.bf16.mxu0 0
  %628 = vmatpush1.bf16.msra.mxu0 0
  %629 = vmatprep.subr.bf16.mxu0 0
  %630 = vmatpush1.bf16.msra.mxu0 0
  %631 = vmatprep.subr.bf16.mxu0 0
  %632 = vmatpush1.bf16.msra.mxu0 0
  %633 = vmatprep.subr.bf16.mxu0 0
  %634 = vmatpush1.bf16.msra.mxu0 0
  %635 = vmatprep.subr.bf16.mxu0 0
  %636 = vmatpush1.bf16.msra.mxu0 0
  %637 = vmatprep.subr.bf16.mxu0 0
  %638 = vmatpush1.bf16.msra.mxu0 0
  %639 = vmatprep.subr.bf16.mxu0 0
  %640 = vmatpush1.bf16.msra.mxu0 0
  %641 = vmatprep.subr.bf16.mxu0 0
  %642 = vmatpush1.bf16.msra.mxu0 0
  %643 = vmatprep.subr.bf16.mxu0 0
  %644 = vmatpush1.bf16.msra.mxu0 0
  %645 = vmatprep.subr.bf16.mxu0 0
  %646 = vmatpush1.bf16.msra.mxu0 0
  %647 = vmatprep.subr.bf16.mxu0 0
  %648 = vmatpush1.bf16.msra.mxu0 0
  %649 = vmatprep.subr.bf16.mxu0 0
  %650 = vmatpush1.bf16.msra.mxu0 0
  %651 = vmatprep.subr.bf16.mxu0 0
  %652 = vmatpush1.bf16.msra.mxu0 0
  %653 = vmatprep.subr.bf16.mxu0 0
  %654 = vmatpush1.bf16.msra.mxu0 0
  %655 = vmatprep.mubr.bf16.mxu0 0
  %656 = vmatmul.mubr.bf16.gmra.mrb[0].mxu0 %v621
  %v657 = vpop.f32.mrb[0].mxu0
  %v658 = vadd.f32 0.0, %v657
  %v659 = vpop.f32.mrb[0].mxu0
  %v660 = vpop.f32.mrb[0].mxu0
  %v661 = vpop.f32.mrb[0].mxu0
  %662 = vdwg.mxu0
  %v663 = vtanh.pop %v658
  %v664 = vpack.c.bf16 %v663, %v663
  %v665 = vlaneseq
  %v666 = vshrl.u32 %v665, 7
  %v667 = vsub.s32 3, %v666
  %v668 = vrot.slane %v70, %v667
  %v669 = vlaneseq
  %v670 = vshrl.u32 %v669, 7
  %v671 = vsub.s32 3, %v670
  %v672 = vrot.slane %v71, %v671
  %v677 = vunpack.c.l.b16 %v40
  %v678 = vunpack.c.h.b16 %v40
  %v679 = vunpack.c.l.b16 %v41
  %v680 = vunpack.c.h.b16 %v41
  %v681 = vunpack.c.l.b16 %v42
  %v682 = vunpack.c.h.b16 %v42
  %v683 = vunpack.c.l.b16 %v43
  %v684 = vunpack.c.h.b16 %v43
  %v685 = vpack.c.b16 %v679, %v677
  %v686 = vpack.c.b16 %v680, %v678
  %v687 = vpack.c.b16 %v683, %v681
  %v688 = vpack.c.b16 %v684, %v682
  %v694 = vsel %vm286, %v664, 0
  %696 = vmatprep.subr.bf16.mxu0 %v686
  %697 = vmatpush1.bf16.msra.mxu0 %v685
  %698 = vmatprep.subr.bf16.mxu0 %v688
  %699 = vmatpush1.bf16.msra.mxu0 %v687
  %700 = vmatprep.subr.bf16.mxu0 0
  %701 = vmatpush1.bf16.msra.mxu0 0
  %702 = vmatprep.subr.bf16.mxu0 0
  %703 = vmatpush1.bf16.msra.mxu0 0
  %704 = vmatprep.subr.bf16.mxu0 0
  %705 = vmatpush1.bf16.msra.mxu0 0
  %706 = vmatprep.subr.bf16.mxu0 0
  %707 = vmatpush1.bf16.msra.mxu0 0
  %708 = vmatprep.subr.bf16.mxu0 0
  %709 = vmatpush1.bf16.msra.mxu0 0
  %710 = vmatprep.subr.bf16.mxu0 0
  %711 = vmatpush1.bf16.msra.mxu0 0
  %712 = vmatprep.subr.bf16.mxu0 0
  %713 = vmatpush1.bf16.msra.mxu0 0
  %714 = vmatprep.subr.bf16.mxu0 0
  %715 = vmatpush1.bf16.msra.mxu0 0
  %716 = vmatprep.subr.bf16.mxu0 0
  %717 = vmatpush1.bf16.msra.mxu0 0
  %718 = vmatprep.subr.bf16.mxu0 0
  %719 = vmatpush1.bf16.msra.mxu0 0
  %720 = vmatprep.subr.bf16.mxu0 0
  %721 = vmatpush1.bf16.msra.mxu0 0
  %722 = vmatprep.subr.bf16.mxu0 0
  %723 = vmatpush1.bf16.msra.mxu0 0
  %724 = vmatprep.subr.bf16.mxu0 0
  %725 = vmatpush1.bf16.msra.mxu0 0
  %726 = vmatprep.subr.bf16.mxu0 0
  %727 = vmatpush1.bf16.msra.mxu0 0
  %728 = vmatprep.mubr.bf16.mxu0 0
  %729 = vmatmul.mubr.bf16.gmra.mrb[0].mxu0 %v694
  %v730 = vpop.f32.mrb[0].mxu0
  %v731 = vadd.f32 %v668, %v730
  %v732 = vpop.f32.mrb[0].mxu0
  %v733 = vadd.f32 %v672, %v732
  %v734 = vpop.f32.mrb[0].mxu0
  %v735 = vpop.f32.mrb[0].mxu0
  %736 = vdwg.mxu0
  %vm737 = vcmp.gt.f32.partialorder %v731, 0.0
  %vm738 = vcmp.gt.f32.partialorder %v733, 0.0
  %v739 = vmul.f32 %v731, 0.1
  %v740 = vmul.f32 %v733, 0.1
  %v741 = vsel %vm737, %v731, %v739
  %v742 = vsel %vm738, %v733, %v740
  %v743 = vpack.c.bf16 %v741, %v741
  %v744 = vpack.c.bf16 %v742, %v742
  %v745 = vlaneseq
  %v746 = vshrl.u32 %v745, 7
  %v747 = vsub.s32 4, %v746
  %v748 = vrot.slane %v70, %v747
  %v769 = vunpack.c.l.b16 %v44
  %v770 = vunpack.c.l.b16 %v45
  %v771 = vunpack.c.l.b16 %v46
  %v772 = vunpack.c.l.b16 %v47
  %v773 = vunpack.c.l.b16 %v48
  %v774 = vunpack.c.l.b16 %v49
  %v775 = vunpack.c.l.b16 %v50
  %v776 = vunpack.c.l.b16 %v51
  %v777 = vunpack.c.l.b16 %v52
  %v778 = vunpack.c.l.b16 %v53
  %v779 = vunpack.c.l.b16 %v54
  %v780 = vunpack.c.l.b16 %v55
  %v781 = vunpack.c.l.b16 %v56
  %v782 = vunpack.c.l.b16 %v57
  %v783 = vunpack.c.l.b16 %v58
  %v784 = vunpack.c.l.b16 %v59
  %v785 = vunpack.c.l.b16 %v60
  %v786 = vunpack.c.l.b16 %v61
  %v787 = vunpack.c.l.b16 %v62
  %v788 = vunpack.c.l.b16 %v63
  %v789 = vpack.c.b16 %v770, %v769
  %v790 = vpack.c.b16 %v772, %v771
  %v791 = vpack.c.b16 %v774, %v773
  %v792 = vpack.c.b16 %v776, %v775
  %v793 = vpack.c.b16 %v778, %v777
  %v794 = vpack.c.b16 %v780, %v779
  %v795 = vpack.c.b16 %v782, %v781
  %v796 = vpack.c.b16 %v784, %v783
  %v797 = vpack.c.b16 %v786, %v785
  %v798 = vpack.c.b16 %v788, %v787
  %v810 = vsel %vm286, %v744, 0
  %812 = vmatprep.subr.bf16.mxu0 0
  %813 = vmatpush1.bf16.msra.mxu0 %v789
  %814 = vmatprep.subr.bf16.mxu0 0
  %815 = vmatpush1.bf16.msra.mxu0 %v790
  %816 = vmatprep.subr.bf16.mxu0 0
  %817 = vmatpush1.bf16.msra.mxu0 %v791
  %818 = vmatprep.subr.bf16.mxu0 0
  %819 = vmatpush1.bf16.msra.mxu0 %v792
  %820 = vmatprep.subr.bf16.mxu0 0
  %821 = vmatpush1.bf16.msra.mxu0 %v793
  %822 = vmatprep.subr.bf16.mxu0 0
  %823 = vmatpush1.bf16.msra.mxu0 %v794
  %824 = vmatprep.subr.bf16.mxu0 0
  %825 = vmatpush1.bf16.msra.mxu0 %v795
  %826 = vmatprep.subr.bf16.mxu0 0
  %827 = vmatpush1.bf16.msra.mxu0 %v796
  %828 = vmatprep.subr.bf16.mxu0 0
  %829 = vmatpush1.bf16.msra.mxu0 %v797
  %830 = vmatprep.subr.bf16.mxu0 0
  %831 = vmatpush1.bf16.msra.mxu0 %v798
  %832 = vmatprep.subr.bf16.mxu0 0
  %833 = vmatpush1.bf16.msra.mxu0 0
  %834 = vmatprep.subr.bf16.mxu0 0
  %835 = vmatpush1.bf16.msra.mxu0 0
  %836 = vmatprep.subr.bf16.mxu0 0
  %837 = vmatpush1.bf16.msra.mxu0 0
  %838 = vmatprep.subr.bf16.mxu0 0
  %839 = vmatpush1.bf16.msra.mxu0 0
  %840 = vmatprep.subr.bf16.mxu0 0
  %841 = vmatpush1.bf16.msra.mxu0 0
  %842 = vmatprep.subr.bf16.mxu0 0
  %843 = vmatpush1.bf16.msra.mxu0 0
  %844 = vmatprep.mubr.bf16.mxu0 %v810
  %845 = vmatmul.mubr.bf16.gmra.mrb[0].mxu0 %v743
  %v846 = vpop.f32.mrb[0].mxu0
  %v847 = vadd.f32 %v748, %v846
  %v848 = vpop.f32.mrb[0].mxu0
  %v849 = vpop.f32.mrb[0].mxu0
  %v850 = vpop.f32.mrb[0].mxu0
  %851 = vdwg.mxu0
  %v852 = vld [vmem:[%s1] sm:$0x3]
  %vm853 = vcmp.gt.s32.totalorder %v852, 0
  %v854 = vsel %vm853, 1, 0
  %v855 = vcvt.s32.f32 %v854
  %v856 = vsel %vm102, %v855, 0.0
  %vm857 = vcmp.lt.s32.totalorder %v77, 25
  %v858 = vsub.f32 %v856, 1.0
  %v859 = vmul.f32 %v858, 10000.0
  %v860 = vsel %vm857, %v859, 0.0
  %v861 = vadd.f32 %v847, %v860
  %vm862 = vcmp.gt.f32.partialorder %v847, 0.0
  %v863 = vmul.f32 %v847, 0.1
  %v864 = vsel %vm862, %v847, %v863
  %v865 = vlaneseq
  %v866 = vshrl.u32 %v865, 7
  %v867 = vsub.s32 5, %v866
  %v868 = vrot.slane %v70, %v867
  %870 = vrot.lane.b32.xlu0 %v868, 86
  %v871 = vpop.permute.xlu0 %870
  %v873 = vmul.f32 %v864, %v871
  %875 = vrot.lane.b32.xlu0 %v873, 42
  %v876 = vpop.permute.xlu0 %875
  %vm878 = vcmask 123904
  %v879 = vsel %vm878, %v876, 0.0
  %880 = vadd.xlane.f32.xlu0 %v879
  %v881 = vpop.xlane.xlu0 %880
  %v882 = vadd.f32 %v881, %v868
  %vm883 = vcmp.lt.s32.totalorder %v77, 56
  %v884 = vsel %vm883, %v861, 0.0
  %885 = vst [vmem:[%s4] sm:$0x3] %v884
  %887 = vrot.lane.b32.xlu0 %v882, 39
  %v888 = vpop.permute.xlu0 %887
  %vm890 = vcmask 452024
  %891 = vst.msk [vmem:[%s4] sm:$0x3] %vm890, %v888
  %vm892 = vcmask 197632
  %v893 = vsel %vm892, %v861, -inf
  %894 = vmax.xlane.f32.xlu0 %v893
  %v895 = vpop.xlane.xlu0 %894
  %v896 = vsub.f32 %v861, %v895
  %v897 = vmul.f32 %v896, 1.442695
  %v898 = vpow.pop %v897
  %v899 = vsel %vm892, %v898, 0.0
  %900 = vadd.xlane.f32.xlu0 %v899
  %v901 = vpop.xlane.xlu0 %900
  %v902 = vrcp.pop %v901
  %v903 = vmul.f32 %v898, %v902
  %905 = vrot.lane.b32.xlu0 %v903, 56
  %v906 = vpop.permute.xlu0 %905
  %vm908 = vcmask 656832
  %909 = vst.msk [vmem:[%s4] sm:$0x3] %vm908, %v906
  %vm910 = vcmask 427408
  %v911 = vsel %vm910, %v861, -inf
  %912 = vmax.xlane.f32.xlu0 %v911
  %v913 = vpop.xlane.xlu0 %912
  %v914 = vsub.f32 %v861, %v913
  %v915 = vmul.f32 %v914, 1.442695
  %v916 = vpow.pop %v915
  %918 = vrot.lane.b32.xlu0 %v916, 78
  %v919 = vpop.permute.xlu0 %918
  %vm921 = vcmask 17408
  %v922 = vsel %vm921, %v919, 0.0
  %923 = vadd.xlane.f32.xlu0 %v922
  %v924 = vpop.xlane.xlu0 %923
  %v925 = vrcp.pop %v924
  %v926 = vmul.f32 %v916, %v925
  %928 = vrot.lane.b32.xlu0 %v926, 31
  %v929 = vpop.permute.xlu0 %928
  %vm931 = vcmask 681608
  %932 = vst.msk [vmem:[%s4] sm:$0x3] %vm931, %v929
  %vm933 = vcmask 443816
  %v934 = vsel %vm933, %v861, -inf
  %935 = vmax.xlane.f32.xlu0 %v934
  %v936 = vpop.xlane.xlu0 %935
  %v937 = vsub.f32 %v861, %v936
  %v938 = vmul.f32 %v937, 1.442695
  %v939 = vpow.pop %v938
  %941 = vrot.lane.b32.xlu0 %v939, 75
  %v942 = vpop.permute.xlu0 %941
  %vm944 = vcmask 9216
  %v945 = vsel %vm944, %v942, 0.0
  %946 = vadd.xlane.f32.xlu0 %v945
  %v947 = vpop.xlane.xlu0 %946
  %v948 = vrcp.pop %v947
  %v949 = vmul.f32 %v939, %v948
  %951 = vrot.lane.b32.xlu0 %v949, 31
  %v952 = vpop.permute.xlu0 %951
  %vm954 = vcmask 698016
  %955 = vst.msk [vmem:[%s4] sm:$0x3] %vm954, %v952
  // Predicated region
  $region18: #{forward.3} parent=0 // pred_check
    _
  $region19: #{forward.3} parent=0 // pred_check_branch
    %957 = sbr.rel (0) target = $region21
  $region20: #{forward.3} parent=0 // pred_region
    _
  $region21: #{forward.3} parent=0 // pred_fallthru
    _
  // Predicated region
  $region22: #{forward.3} parent=0 // pred_check
    _
  $region23: #{forward.3} parent=0 // pred_check_branch
    %959 = sbr.rel (0) target = $region25
  $region24: #{forward.3} parent=0 // pred_region
    _
  $region25: #{forward.3} parent=0 // pred_fallthru
    _

</llo_original>
